<compile_context>
chip_gen: v6e
topology: v6e:2x2x1
jax: 0.10.0
libtpu: 0.0.40
codegen_flags: <defaults>
</compile_context>

<pallas_src>
import functools
import math

import numpy as np
import jax
import jax.numpy as jnp
from jax.experimental import pallas as pl
from jax.experimental.pallas import tpu as pltpu

F32 = jnp.float32
EPS = 1e-5


# ==================================================================
# Pallas kernels
# ==================================================================
def _gemm_kernel(*refs, relu, in_affine, has_add):
    """1x1 conv GEMM: out = maybe_relu(relu?(a*si+ti) @ b * s + t) [+ addend]."""
    it = iter(refs)
    a_ref, b_ref, s_ref, t_ref = next(it), next(it), next(it), next(it)
    si_ref = ti_ref = add_ref = None
    if in_affine:
        si_ref, ti_ref = next(it), next(it)
    if has_add:
        add_ref = next(it)
    o_ref = next(it)

    a = a_ref[...]
    if in_affine:                              # fused pre-activation BN + ReLU
        a = jnp.maximum(a * si_ref[0] + ti_ref[0], 0.0)
    r = jnp.dot(a, b_ref[...], preferred_element_type=jnp.float32)
    r = r * s_ref[0] + t_ref[0]                # folded BN / bias
    if relu:
        r = jnp.maximum(r, 0.0)
    if has_add:                                # fused residual add
        r = r + add_ref[...]
    o_ref[...] = r.astype(o_ref.dtype)


def _conv_row_kernel(x_ref, w_ref, s_ref, t_ref, o_ref, acc_ref, *, kw, wo, relu):
    """One output row per (n, y) grid point; row taps on the reduction grid axis,
    column taps as in-VMEM slices (no im2col in HBM)."""
    dy = pl.program_id(2)

    @pl.when(dy == 0)
    def _init():
        acc_ref[...] = jnp.zeros_like(acc_ref)

    a = x_ref[0, 0]                            # (wrow, ceff) padded input row, in VMEM
    wdy = w_ref[dy]                            # (kw, ceff, cout) weights for this row tap
    acc = acc_ref[...]
    for dx in range(kw):
        acc = acc + jnp.dot(a[dx:dx + wo, :], wdy[dx],
                            preferred_element_type=jnp.float32)
    acc_ref[...] = acc

    @pl.when(dy == pl.num_programs(2) - 1)
    def _fin():
        r = acc_ref[...] * s_ref[0] + t_ref[0]
        if relu:
            r = jnp.maximum(r, 0.0)
        o_ref[0, 0] = r.astype(o_ref.dtype)


def _maxpool_kernel(x_ref, o_ref):
    a = x_ref[...]                             # (2*tr, wo, 2, c)
    tr = a.shape[0] // 2
    a = a.reshape(tr, 2, a.shape[1], 2, a.shape[3])   # leading-dim split only (free)
    m = jnp.maximum(a[:, 0], a[:, 1])          # max over the row pair
    o_ref[...] = jnp.max(m, axis=2)            # max over the column pair


def _upsample_add_kernel(r0_ref, r1_ref, y0_ref, y1_ref, mw_ref, up_ref, o_ref, *, rscale):
    """Bilinear align_corners=True row: lerp two gathered source rows, then a tiny
    column-interp matmul, then add the lateral feature map (up1)."""
    i = pl.program_id(1)
    pos = i.astype(jnp.float32) * rscale
    fr = pos - r0_ref[i].astype(jnp.float32)
    a = y0_ref[0, 0]                           # (w, c)  source row r0[i]
    b = y1_ref[0, 0]                           # (w, c)  source row r1[i]
    row = a + fr * (b - a)                     # row lerp
    up = jnp.dot(mw_ref[...], row, preferred_element_type=jnp.float32)   # (W, c)
    o_ref[0, 0] = (up + up_ref[0, 0]).astype(o_ref.dtype)


# ==================================================================
# Op wrappers
# ==================================================================
@functools.partial(jax.jit, static_argnames=("relu",))
def conv1x1(x, w, scale, shift, in_scale=None, in_shift=None, addend=None, *, relu=False):
    """1x1 conv (+ folded BN / bias, optional fused preact and residual add), NHWC."""
    n, h, wd, cin = x.shape
    cout = w.shape[1]
    m = n * h * wd
    a = x.reshape(m, cin)
    tm = m if m <= 512 else 512
    grid = ((m + tm - 1) // tm,)

    in_specs = [
        pl.BlockSpec((tm, cin), lambda i: (i, 0)),
        pl.BlockSpec((cin, cout), lambda i: (0, 0)),     # weight resident in VMEM
        pl.BlockSpec((1, cout), lambda i: (0, 0)),
        pl.BlockSpec((1, cout), lambda i: (0, 0)),
    ]
    args = [a, w, scale, shift]
    if in_scale is not None:
        in_specs += [pl.BlockSpec((1, cin), lambda i: (0, 0)),
                     pl.BlockSpec((1, cin), lambda i: (0, 0))]
        args += [in_scale, in_shift]
    if addend is not None:
        in_specs.append(pl.BlockSpec((tm, cout), lambda i: (i, 0)))
        args.append(addend.reshape(m, cout))

    kernel = functools.partial(_gemm_kernel, relu=relu,
                               in_affine=in_scale is not None,
                               has_add=addend is not None)
    out = pl.pallas_call(
        kernel,
        out_shape=jax.ShapeDtypeStruct((m, cout), F32),
        grid_spec=pltpu.PrefetchScalarGridSpec(
            num_scalar_prefetch=0,
            grid=grid,
            in_specs=in_specs,
            out_specs=pl.BlockSpec((tm, cout), lambda i: (i, 0)),
        ),
        compiler_params=pltpu.CompilerParams(dimension_semantics=("parallel",)),
    )(*args)
    return out.reshape(n, h, wd, cout)


@functools.partial(jax.jit, static_argnames=("stride", "padding", "relu"))
def conv_spatial(x, w_hwio, scale, shift, *, stride, padding, relu):
    """kh x kw conv (stride s, pad p), NHWC, via the fused-im2col row kernel."""
    n, h, wd, cin = x.shape
    kh, kw, _, cout = w_hwio.shape
    ho = (h + 2 * padding - kh) // stride + 1
    wo = (wd + 2 * padding - kw) // stride + 1
    xp = jnp.pad(x, ((0, 0), (padding, padding), (padding, padding), (0, 0)))
    if stride == 1:
        xe, wmat = xp, w_hwio                                    # taps sliced in VMEM
    else:
        # strided conv (7x7/s2 stem, Cin=3): pre-fold the kw column taps into channels
        cols = [xp[:, :, dx:dx + stride * (wo - 1) + 1:stride, :] for dx in range(kw)]
        xe = jnp.concatenate(cols, axis=-1)                      # (n, hp, wo, kw*cin)
        wmat = w_hwio.reshape(kh, 1, kw * cin, cout)
    _, hp, wrow, ceff = xe.shape
    kweff = wmat.shape[1]

    kernel = functools.partial(_conv_row_kernel, kw=kweff, wo=wo, relu=relu)
    return pl.pallas_call(
        kernel,
        out_shape=jax.ShapeDtypeStruct((n, ho, wo, cout), F32),
        grid_spec=pltpu.PrefetchScalarGridSpec(
            num_scalar_prefetch=0,
            grid=(n, ho, kh),
            in_specs=[
                pl.BlockSpec((1, 1, wrow, ceff),
                             lambda b, y, dy: (b, stride * y + dy, 0, 0)),
                pl.BlockSpec((kh, kweff, ceff, cout), lambda b, y, dy: (0, 0, 0, 0)),
                pl.BlockSpec((1, cout), lambda b, y, dy: (0, 0)),
                pl.BlockSpec((1, cout), lambda b, y, dy: (0, 0)),
            ],
            out_specs=pl.BlockSpec((1, 1, wo, cout), lambda b, y, dy: (b, y, 0, 0)),
            scratch_shapes=[pltpu.VMEM((wo, cout), jnp.float32)],
        ),
        compiler_params=pltpu.CompilerParams(
            dimension_semantics=("parallel", "parallel", "arbitrary")),
    )(xe, wmat, scale, shift)


@jax.jit
def maxpool2(x):
    """2x2 / stride-2 max pool, single read of the input (no strided HBM slices)."""
    n, h, wd, c = x.shape
    ho, wo = h // 2, wd // 2
    rows = n * h
    x4 = x.reshape(rows, wo, 2, c)             # free, contiguous view
    tr = min(8, rows // 2)
    grid = (((rows // 2) + tr - 1) // tr,)
    out = pl.pallas_call(
        _maxpool_kernel,
        out_shape=jax.ShapeDtypeStruct((rows // 2, wo, c), x.dtype),
        grid_spec=pltpu.PrefetchScalarGridSpec(
            num_scalar_prefetch=0,
            grid=grid,
            in_specs=[pl.BlockSpec((2 * tr, wo, 2, c), lambda i: (i, 0, 0, 0))],
            out_specs=pl.BlockSpec((tr, wo, c), lambda i: (i, 0, 0)),
        ),
        compiler_params=pltpu.CompilerParams(dimension_semantics=("parallel",)),
    )(x4)
    return out.reshape(n, ho, wo, c)


def _col_interp_matrix(out_size, in_size):
    m = np.zeros((out_size, in_size), np.float32)
    if in_size == 1 or out_size == 1:
        m[:, 0] = 1.0
        return m
    scale = np.float32((in_size - 1) / (out_size - 1))
    pos = np.arange(out_size, dtype=np.float32) * scale
    i0 = np.minimum(np.floor(pos).astype(np.int32), in_size - 1)
    i1 = np.minimum(i0 + 1, in_size - 1)
    f = pos - i0
    m[np.arange(out_size), i0] += 1.0 - f
    m[np.arange(out_size), i1] += f
    return m


@jax.jit
def upsample_add(y, up1):
    """Bilinear align_corners=True upsample of y to up1's spatial size, fused with + up1."""
    n, h, w, c = y.shape
    _, ho, wo, _ = up1.shape
    rscale = float((h - 1) / (ho - 1)) if (ho > 1 and h > 1) else 0.0
    pos = np.arange(ho, dtype=np.float32) * np.float32(rscale)
    r0 = np.minimum(np.floor(pos).astype(np.int32), h - 1)
    r1 = np.minimum(r0 + 1, h - 1)
    mw = jnp.asarray(_col_interp_matrix(wo, w))

    kernel = functools.partial(_upsample_add_kernel, rscale=rscale)
    return pl.pallas_call(
        kernel,
        out_shape=jax.ShapeDtypeStruct((n, ho, wo, c), F32),
        grid_spec=pltpu.PrefetchScalarGridSpec(
            num_scalar_prefetch=2,
            grid=(n, ho),
            in_specs=[
                pl.BlockSpec((1, 1, w, c), lambda b, i, r0, r1: (b, r0[i], 0, 0)),
                pl.BlockSpec((1, 1, w, c), lambda b, i, r0, r1: (b, r1[i], 0, 0)),
                pl.BlockSpec((wo, w), lambda b, i, r0, r1: (0, 0)),
                pl.BlockSpec((1, 1, wo, c), lambda b, i, r0, r1: (b, i, 0, 0)),
            ],
            out_specs=pl.BlockSpec((1, 1, wo, c), lambda b, i, r0, r1: (b, i, 0, 0)),
        ),
        compiler_params=pltpu.CompilerParams(
            dimension_semantics=("arbitrary", "arbitrary")),
    )(jnp.asarray(r0), jnp.asarray(r1), y, y, mw, up1)


# ==================================================================
# Parameter init (mirrors HourglassNet.__init__; BN folded once at init)
# ==================================================================
class KeyGen:
    def __init__(self, key):
        self.key = key
        self.count = 0

    def __call__(self):
        self.count += 1
        return jax.random.fold_in(self.key, self.count)


_BN_SCALE = 1.0 / math.sqrt(1.0 + EPS)   # eval-mode BN at init stats: gamma / sqrt(var + eps)


def init_conv(kg, kh, kw, cin, cout, with_bn):
    fan_out = kh * kw * cout                         # kaiming_normal_, mode='fan_out', relu
    std = math.sqrt(2.0 / fan_out)
    w = jax.random.normal(kg(), (kh, kw, cin, cout), F32) * std
    if kh == 1 and kw == 1:
        w = w.reshape(cin, cout)                     # 1x1 convs stored GEMM-ready
    b = jnp.zeros((cout,), F32)                      # conv bias init to 0
    if with_bn:                                      # fold eval-mode BN into (scale, shift)
        s = jnp.full((cout,), _BN_SCALE, F32)
        t = b * _BN_SCALE                            # (b - mean) * s + beta
    else:
        s = jnp.ones((cout,), F32)
        t = b
    return {"w": w, "scale": s.reshape(1, cout), "shift": t.reshape(1, cout)}


def init_preact(cin):
    """Pre-activation BN (+ReLU) folded to a per-input-channel affine."""
    return {"scale": jnp.full((1, cin), _BN_SCALE, F32),
            "shift": jnp.zeros((1, cin), F32)}


def init_bottleneck(kg, inplanes, outplanes, stride=1, ptype="preact"):
    planes = outplanes // 2
    p = {"stride": stride}
    p["shortcut"] = (init_conv(kg, 1, 1, inplanes, outplanes, with_bn=False)
                     if (inplanes != outplanes or stride != 1) else None)
    p["preact"] = init_preact(inplanes) if ptype != "no_preact" else None
    p["conv1"] = init_conv(kg, 1, 1, inplanes, planes, with_bn=True)
    p["conv2"] = init_conv(kg, 3, 3, planes, planes, with_bn=True)
    p["conv3"] = init_conv(kg, 1, 1, planes, outplanes, with_bn=False)
    return p


def init_res_seq(kg, inplanes, outplanes, num_blocks, stride=1, ptype=None):
    preact = "no_preact" if ptype == "first" else "preact"
    blocks = [init_bottleneck(kg, inplanes, outplanes, stride, preact)]
    for _ in range(1, num_blocks):
        blocks.append(init_bottleneck(kg, outplanes, outplanes, 1, "preact"))
    return blocks


def init_hourglass(kg, num_blocks, planes, depth):
    hgp = []
    for i in range(depth):
        nres = 4 if i == 0 else 3
        hgp.append([init_res_seq(kg, planes, planes, num_blocks) for _ in range(nres)])
    return hgp


def init_hourglassnet(key, num_classes, num_stacks, num_blocks, depth, num_feats):
    kg = KeyGen(key)
    p = {"num_stacks": num_stacks, "depth": depth}
    p["pre"] = init_conv(kg, 7, 7, 3, 64, with_bn=True)
    p["res1"] = init_res_seq(kg, 64, 256, 1, stride=1, ptype="first")
    p["res2"] = init_res_seq(kg, 256, 256, 1)
    p["res3"] = init_res_seq(kg, 256, num_feats, 1)
    p["hg"], p["res"], p["proj"], p["heatmap"] = [], [], [], []
    p["proj_"], p["heatmap_"] = [], []
    for i in range(num_stacks):
        p["hg"].append(init_hourglass(kg, num_blocks, num_feats, depth))
        p["res"].append(init_res_seq(kg, num_feats, num_feats, num_blocks))
        p["proj"].append(init_conv(kg, 1, 1, num_feats, num_feats, with_bn=True))
        p["heatmap"].append(init_conv(kg, 1, 1, num_feats, num_classes, with_bn=False))
        if i < num_stacks - 1:
            p["proj_"].append(init_conv(kg, 1, 1, num_feats, num_feats, with_bn=False))
            p["heatmap_"].append(init_conv(kg, 1, 1, num_classes, num_feats, with_bn=False))
    return p


# ==================================================================
# Forward pass (matches HourglassNet.forward)
# ==================================================================
def bottleneck_fwd(bp, x):
    pre = bp["preact"]
    c1, c2, c3 = bp["conv1"], bp["conv2"], bp["conv3"]
    # conv1 (1x1) with the pre-activation BN+ReLU fused onto its input tile
    h = conv1x1(x, c1["w"], c1["scale"], c1["shift"],
                in_scale=None if pre is None else pre["scale"],
                in_shift=None if pre is None else pre["shift"],
                relu=True)
    # conv2 (3x3, pad 1) — fused-im2col row kernel
    h = conv_spatial(h, c2["w"], c2["scale"], c2["shift"],
                     stride=bp["stride"], padding=1, relu=True)
    # shortcut on the *pre-preact* input
    if bp["shortcut"] is not None:
        sc = bp["shortcut"]
        y = conv1x1(x, sc["w"], sc["scale"], sc["shift"], relu=False)
    else:
        y = x
    # conv3 (1x1) with the residual add fused into the GEMM epilogue
    return conv1x1(h, c3["w"], c3["scale"], c3["shift"], addend=y, relu=False)


def res_seq_fwd(blocks, x):
    for bp in blocks:
        x = bottleneck_fwd(bp, x)
    return x


def hourglass_fwd(hgp, x, depth):
    def rec(n, t):
        level = hgp[n - 1]
        up1 = res_seq_fwd(level[0], t)
        low1 = maxpool2(t)
        low1 = res_seq_fwd(level[1], low1)
        low2 = rec(n - 1, low1) if n > 1 else res_seq_fwd(level[3], low1)
        low3 = res_seq_fwd(level[2], low2)
        return upsample_add(low3, up1)          # bilinear upsample + add, fused
    return rec(depth, x)


def hourglassnet_fwd(p, x_nchw):
    x = jnp.transpose(x_nchw, (0, 2, 3, 1))     # NCHW -> NHWC
    pre = p["pre"]
    x = conv_spatial(x, pre["w"], pre["scale"], pre["shift"],
                     stride=2, padding=3, relu=True)
    x = res_seq_fwd(p["res1"], x)
    x = maxpool2(x)
    x = res_seq_fwd(p["res2"], x)
    x = res_seq_fwd(p["res3"], x)
    outs = []
    for i in range(p["num_stacks"]):
        y = hourglass_fwd(p["hg"][i], x, p["depth"])
        y = res_seq_fwd(p["res"][i], y)
        pj = p["proj"][i]
        y = conv1x1(y, pj["w"], pj["scale"], pj["shift"], relu=True)
        hmc = p["heatmap"][i]
        hm = conv1x1(y, hmc["w"], hmc["scale"], hmc["shift"], relu=False)
        outs.append(jnp.transpose(hm, (0, 3, 1, 2)))            # back to NCHW
        if i < p["num_stacks"] - 1:
            pjc, hc = p["proj_"][i], p["heatmap_"][i]
            t1 = conv1x1(y, pjc["w"], pjc["scale"], pjc["shift"], addend=x, relu=False)
            x = conv1x1(hm, hc["w"], hc["scale"], hc["shift"], addend=t1, relu=False)
    return outs


# ==================================================================
if __name__ == "__main__":
    key = jax.random.PRNGKey(0)
    # Small but structurally faithful config (num_feats shrunk 256 -> 64 for speed).
    batch, num_classes, num_stacks, num_blocks, depth, num_feats = 2, 8, 2, 1, 2, 64
    params = init_hourglassnet(jax.random.fold_in(key, 1),
                               num_classes, num_stacks, num_blocks, depth, num_feats)
    x = jax.random.normal(jax.random.fold_in(key, 2), (batch, 3, 32, 32), F32)  # NCHW

    outs = hourglassnet_fwd(params, x)
    outs = [jax.block_until_ready(o) for o in outs]

    assert len(outs) == num_stacks
    for o in outs:
        assert o.shape == (batch, num_classes, 8, 8), o.shape
        assert bool(jnp.all(jnp.isfinite(o)))
    print("KERNEL_OK")
</pallas_src>

<mosaic_0001>
module attributes {stable_mosaic.version = 11 : i64} {
  func.func @_conv_row_kernel(%arg0: i32, %arg1: i32, %arg2: i32, %arg3: memref<1x1x16x21xf32, #tpu.memory_space<vmem>>, %arg4: memref<7x1x21x64xf32, #tpu.memory_space<vmem>>, %arg5: memref<1x64xf32, #tpu.memory_space<vmem>>, %arg6: memref<1x64xf32, #tpu.memory_space<vmem>>, %arg7: memref<1x1x16x64xf32, #tpu.memory_space<vmem>>, %arg8: memref<16x64xf32, #tpu.memory_space<vmem>>) attributes {dimension_semantics = [#tpu.dimension_semantics<parallel>, #tpu.dimension_semantics<parallel>, #tpu.dimension_semantics<arbitrary>], iteration_bounds = array<i64: 2, 16, 7>, scalar_prefetch = 0 : i64, scratch_operands = 1 : i64, tpu.core_type = #tpu.core_type<tc>, window_params = [{transform_indices = @transform_0, window_bounds = array<i64: 1, 1, 16, 21>}, {pipeline_mode = #tpu.pipeline_mode<synchronous>, transform_indices = @transform_1, window_bounds = array<i64: 7, 1, 21, 64>}, {pipeline_mode = #tpu.pipeline_mode<synchronous>, transform_indices = @transform_2, window_bounds = array<i64: 1, 64>}, {pipeline_mode = #tpu.pipeline_mode<synchronous>, transform_indices = @transform_3, window_bounds = array<i64: 1, 64>}, {transform_indices = @transform_4, window_bounds = array<i64: 1, 1, 16, 64>}]} {
    %c0_i32 = arith.constant 0 : i32
    %0 = arith.cmpi eq, %arg2, %c0_i32 : i32
    %1 = arith.extui %0 : i1 to i32
    %c0_i32_0 = arith.constant 0 : i32
    %2 = arith.cmpi ne, %1, %c0_i32_0 : i32
    scf.if %2 {
      %cst_12 = arith.constant 0.000000e+00 : f32
      %16 = vector.broadcast %cst_12 : f32 to vector<16x64xf32>
      %c0_13 = arith.constant 0 : index
      %c0_14 = arith.constant 0 : index
      %17 = vector.load %arg8[%c0_13, %c0_14] : memref<16x64xf32, #tpu.memory_space<vmem>>, vector<16x64xf32>
      tpu.vector_store %arg8[%c0_13, %c0_14], %16 {strides = array<i32>} : memref<16x64xf32, #tpu.memory_space<vmem>>, vector<16x64xf32>,
    } else {
    }
    %c0 = arith.constant 0 : index
    %c0_1 = arith.constant 0 : index
    %c0_2 = arith.constant 0 : index
    %c0_3 = arith.constant 0 : index
    %3 = vector.load %arg3[%c0, %c0_1, %c0_2, %c0_3] : memref<1x1x16x21xf32, #tpu.memory_space<vmem>>, vector<1x1x16x21xf32>
    %4 = vector.shape_cast %3 : vector<1x1x16x21xf32> to vector<16x21xf32>
    %5 = arith.index_cast %arg2 : i32 to index
    %c0_4 = arith.constant 0 : index
    %c0_5 = arith.constant 0 : index
    %c0_6 = arith.constant 0 : index
    %6 = vector.load %arg4[%5, %c0_4, %c0_5, %c0_6] : memref<7x1x21x64xf32, #tpu.memory_space<vmem>>, vector<1x1x21x64xf32>
    %7 = vector.shape_cast %6 : vector<1x1x21x64xf32> to vector<1x21x64xf32>
    %c0_7 = arith.constant 0 : index
    %c0_8 = arith.constant 0 : index
    %8 = vector.load %arg8[%c0_7, %c0_8] : memref<16x64xf32, #tpu.memory_space<vmem>>, vector<16x64xf32>
    %9 = vector.shape_cast %7 : vector<1x21x64xf32> to vector<21x64xf32>
    %cst = arith.constant dense<0.000000e+00> : vector<16x64xf32>
    %10 = tpu.matmul %4, %9, %cst {dimension_numbers = #tpu.dot_dimension_numbers<[1], [0], [0], [1], [0, 0, 1, 1], [], []>} : vector<16x21xf32>, vector<21x64xf32>, vector<16x64xf32> -> vector<16x64xf32>
    %11 = arith.addf %8, %10 : vector<16x64xf32>
    %c0_9 = arith.constant 0 : index
    %c0_10 = arith.constant 0 : index
    %12 = vector.load %arg8[%c0_9, %c0_10] : memref<16x64xf32, #tpu.memory_space<vmem>>, vector<16x64xf32>
    tpu.vector_store %arg8[%c0_9, %c0_10], %11 {strides = array<i32>} : memref<16x64xf32, #tpu.memory_space<vmem>>, vector<16x64xf32>,
    %c6_i32 = arith.constant 6 : i32
    %13 = arith.cmpi eq, %arg2, %c6_i32 : i32
    %14 = arith.extui %13 : i1 to i32
    %c0_i32_11 = arith.constant 0 : i32
    %15 = arith.cmpi ne, %14, %c0_i32_11 : i32
    scf.if %15 {
      %c0_12 = arith.constant 0 : index
      %c0_13 = arith.constant 0 : index
      %16 = vector.load %arg8[%c0_12, %c0_13] : memref<16x64xf32, #tpu.memory_space<vmem>>, vector<16x64xf32>
      %c0_14 = arith.constant 0 : index
      %c0_15 = arith.constant 0 : index
      %17 = vector.load %arg5[%c0_14, %c0_15] : memref<1x64xf32, #tpu.memory_space<vmem>>, vector<1x64xf32>
      %18 = vector.shape_cast %17 : vector<1x64xf32> to vector<64xf32>
      %19 = vector.shape_cast %18 : vector<64xf32> to vector<1x64xf32>
      %20 = vector.broadcast %19 : vector<1x64xf32> to vector<16x64xf32>
      %21 = arith.mulf %16, %20 : vector<16x64xf32>
      %c0_16 = arith.constant 0 : index
      %c0_17 = arith.constant 0 : index
      %22 = vector.load %arg6[%c0_16, %c0_17] : memref<1x64xf32, #tpu.memory_space<vmem>>, vector<1x64xf32>
      %23 = vector.shape_cast %22 : vector<1x64xf32> to vector<64xf32>
      %24 = vector.shape_cast %23 : vector<64xf32> to vector<1x64xf32>
      %25 = vector.broadcast %24 : vector<1x64xf32> to vector<16x64xf32>
      %26 = arith.addf %21, %25 : vector<16x64xf32>
      %cst_18 = arith.constant 0.000000e+00 : f32
      %27 = vector.broadcast %cst_18 : f32 to vector<16x64xf32>
      %28 = arith.maximumf %26, %27 : vector<16x64xf32>
      %c0_19 = arith.constant 0 : index
      %c0_20 = arith.constant 0 : index
      %c0_21 = arith.constant 0 : index
      %c0_22 = arith.constant 0 : index
      %29 = vector.load %arg7[%c0_19, %c0_20, %c0_21, %c0_22] : memref<1x1x16x64xf32, #tpu.memory_space<vmem>>, vector<1x1x16x64xf32>
      %30 = vector.shape_cast %29 : vector<1x1x16x64xf32> to vector<16x64xf32>
      %31 = vector.shape_cast %28 : vector<16x64xf32> to vector<1x1x16x64xf32>
      tpu.vector_store %arg7[%c0_19, %c0_20, %c0_21, %c0_22], %31 {strides = array<i32>} : memref<1x1x16x64xf32, #tpu.memory_space<vmem>>, vector<1x1x16x64xf32>,
    } else {
    }
    return
  }
  func.func @transform_0(%arg0: i32, %arg1: i32, %arg2: i32) -> (i32, i32, i32, i32) {
    %c2_i32 = arith.constant 2 : i32
    %0 = arith.muli %c2_i32, %arg1 : i32
    %1 = arith.addi %0, %arg2 : i32
    %c0_i32 = arith.constant 0 : i32
    %c0_i32_0 = arith.constant 0 : i32
    %c0_i32_1 = arith.constant 0 : i32
    return %arg0, %1, %c0_i32, %c0_i32_0 : i32, i32, i32, i32
  }
  func.func @transform_1(%arg0: i32, %arg1: i32, %arg2: i32) -> (i32, i32, i32, i32) {
    %c0_i32 = arith.constant 0 : i32
    %c0_i32_0 = arith.constant 0 : i32
    %c0_i32_1 = arith.constant 0 : i32
    %c0_i32_2 = arith.constant 0 : i32
    %c0_i32_3 = arith.constant 0 : i32
    return %c0_i32, %c0_i32_0, %c0_i32_1, %c0_i32_2 : i32, i32, i32, i32
  }
  func.func @transform_2(%arg0: i32, %arg1: i32, %arg2: i32) -> (i32, i32) {
    %c0_i32 = arith.constant 0 : i32
    %c0_i32_0 = arith.constant 0 : i32
    %c0_i32_1 = arith.constant 0 : i32
    return %c0_i32, %c0_i32_0 : i32, i32
  }
  func.func @transform_3(%arg0: i32, %arg1: i32, %arg2: i32) -> (i32, i32) {
    %c0_i32 = arith.constant 0 : i32
    %c0_i32_0 = arith.constant 0 : i32
    %c0_i32_1 = arith.constant 0 : i32
    return %c0_i32, %c0_i32_0 : i32, i32
  }
  func.func @transform_4(%arg0: i32, %arg1: i32, %arg2: i32) -> (i32, i32, i32, i32) {
    %c0_i32 = arith.constant 0 : i32
    %c0_i32_0 = arith.constant 0 : i32
    %c0_i32_1 = arith.constant 0 : i32
    return %arg0, %arg1, %c0_i32, %c0_i32_0 : i32, i32, i32, i32
  }
}

</mosaic_0001>

<llo_original>
// kernel: conv_spatial.1
$region0: #{conv_spatial.1}
  #allocation0 [shape = 'u32[]', space=smem, size = 0x4, offset = 0x4, fixed_abs, tag = 'smem constant byte address 0x4 - core index']
  #allocation1 [shape = 'u32[144,128]{1,0:T(1,128)}', space=vmem, size = 0x12000, scoped, tag = 'internal scratch']
  #allocation2 [shape = 'f32[16,64]{1,0:T(8,128)}', space=vmem, size = 0x2000, scoped, tag = 'scratch operand']
  %s0 = inlined_call_operand.vmem [shape: f32[2,38,16,21], index: 0, kind: input, shape index: {}]
  %s1 = inlined_call_operand.vmem [shape: f32[7,1,21,64], index: 1, kind: input, shape index: {}]
  %s2 = inlined_call_operand.vmem [shape: f32[1,64], index: 2, kind: input, shape index: {}]
  %s3 = inlined_call_operand.vmem [shape: f32[1,64], index: 3, kind: input, shape index: {}]
  %s4 = inlined_call_operand.hbm [shape: f32[2,16,16,64], index: 4, kind: output, shape index: {}]
  %s5 = sld [smem:[#allocation0]]
  $region57: #{conv_spatial.1} parent=0
    _
  %s7 = ssub.s32 1, %s5
  %s8 = scalar_select 0, %s7, %s5
  $region1: #{conv_spatial.1} parent=0
    #allocation3 [shape = 'u8[16384]{0}', space=vmem, size = 0x4000, scoped, tag = 'output window, operand 0']
    #allocation4 [shape = 's32[2]{0}', space=sflag, size = 0x8, scoped, tag = 'scoped memory for conv_spatial.1']
    %9 = vsyncpa [#allocation4], 0
    %s10 = scalar_lea.sflag [#allocation4], 1
    %11 = vsyncpa %s10, 0
    loop: start=0, step=1, limit=226
    $region2: #{conv_spatial.1} parent=1 // loop_pre_header
      _
    $region3: #{conv_spatial.1} parent=1 // loop_header
      %s13 = sphi 0, %s17
      %p14 = scmp.ge.s32.totalorder %s13, 226
      %s20 = sphi 0, %s39
      %s21 = sphi 0, %s35
      %s22 = sphi 0, %s31
      %s23 = sphi 0, %s20
      %s24 = sphi 0, %s21
      %s25 = sphi 0, %s22
      %s26 = sphi 0, %s23
      %s27 = sphi 0, %s24
      %s28 = sphi 0, %s25
      %s48 = sphi 0, %s50
      %s51 = sphi 0, %s48
      %s52 = sphi 0, %s51
      %s68 = sphi 0, %s52
      %s72 = sphi 0, %s72
      %s74 = sphi 0, %s72
      %s75 = sphi 0, %s74
      %s89 = sphi 0, %s75
      %s93 = sphi 0, %s93
      %s95 = sphi 0, %s93
      %s96 = sphi 0, %s95
      %s110 = sphi 0, %s96
      %s114 = sphi 0, %s114
      %s116 = sphi 0, %s114
      %s117 = sphi 0, %s116
      %s131 = sphi 0, %s117
      %s139 = sphi 0, %s141
      %s142 = sphi 0, %s139
      %s143 = sphi 0, %s142
      %s159 = sphi 0, %s143
    $region4: #{conv_spatial.1} parent=1 // loop_header_branch
      %16 = sbr.rel (%p14) target = $region8
    $region5: #{conv_spatial.1} parent=1 // loop_body
      %s18 = ssub.s32 %s13, 1
      %s19 = ssub.s32 %s13, 2
      %s29 = sadd.s32 1, %s22
      %p30 = scmp.ge.s32.totalorder %s29, 7
      %s31 = scalar_select %p30, 0, %s29
      %s32 = sadd.s32 1, %s21
      %s33 = scalar_select %p30, %s32, %s21
      %p34 = scmp.ge.s32.totalorder %s33, 16
      %s35 = scalar_select %p34, 0, %s33
      %s36 = sadd.s32 1, %s20
      %s37 = scalar_select %p34, %s36, %s20
      %p38 = scmp.ge.s32.totalorder %s37, 2
      %s39 = scalar_select %p38, 0, %s37
      %s40 = smul.u32 %s21, 2
      %s41 = sadd.s32 %s40, %s22
      %s42 = smul.u32 %s35, 2
      %s43 = sadd.s32 %s42, %s31
      %s44 = ssub.s32 %s20, %s39
      %s45 = ssub.s32 %s41, %s43
      %s46 = sor.u32 %s44, %s45
      %p47 = scmp.eq.s32.totalorder %s46, 0
      %s49 = sadd.s32 %s48, 1
      %s50 = scalar_select %p47, %s48, %s49
      %p53 = pneg %p47
      %p54 = scmp.eq.s32.totalorder %s13, 223
      %p55 = por %p53, %p54
      %p56 = scmp.ne.s32.totalorder %s48, %s51
      %p57 = scmp.eq.s32.totalorder %s13, 0
      %p58 = por %p56, %p57
      %p59 = scmp.ne.s32.totalorder %s48, %s51
      %p60 = scmp.eq.s32.totalorder %s18, 223
      %p61 = por %p59, %p60
      %p62 = scmp.ne.s32.totalorder %s51, %s52
      %p63 = scmp.eq.s32.totalorder %s18, 0
      %p64 = por %p62, %p63
      %p65 = scmp.ne.s32.totalorder %s51, %s52
      %p66 = scmp.eq.s32.totalorder %s19, 223
      %p67 = por %p65, %p66
      %p69 = scmp.ne.s32.totalorder %s52, %s68
      %p70 = scmp.eq.s32.totalorder %s19, 0
      %p71 = por %p69, %p70
      %s73 = sadd.s32 %s72, 1
      %p76 = scmp.eq.s32.totalorder %s13, 223
      %p77 = scmp.ne.s32.totalorder %s72, %s74
      %p78 = scmp.eq.s32.totalorder %s13, 0
      %p79 = por %p77, %p78
      %p80 = scmp.ne.s32.totalorder %s72, %s74
      %p81 = scmp.eq.s32.totalorder %s18, 223
      %p82 = por %p80, %p81
      %p83 = scmp.ne.s32.totalorder %s74, %s75
      %p84 = scmp.eq.s32.totalorder %s18, 0
      %p85 = por %p83, %p84
      %p86 = scmp.ne.s32.totalorder %s74, %s75
      %p87 = scmp.eq.s32.totalorder %s19, 223
      %p88 = por %p86, %p87
      %p90 = scmp.ne.s32.totalorder %s75, %s89
      %p91 = scmp.eq.s32.totalorder %s19, 0
      %p92 = por %p90, %p91
      %s94 = sadd.s32 %s93, 1
      %p97 = scmp.eq.s32.totalorder %s13, 223
      %p98 = scmp.ne.s32.totalorder %s93, %s95
      %p99 = scmp.eq.s32.totalorder %s13, 0
      %p100 = por %p98, %p99
      %p101 = scmp.ne.s32.totalorder %s93, %s95
      %p102 = scmp.eq.s32.totalorder %s18, 223
      %p103 = por %p101, %p102
      %p104 = scmp.ne.s32.totalorder %s95, %s96
      %p105 = scmp.eq.s32.totalorder %s18, 0
      %p106 = por %p104, %p105
      %p107 = scmp.ne.s32.totalorder %s95, %s96
      %p108 = scmp.eq.s32.totalorder %s19, 223
      %p109 = por %p107, %p108
      %p111 = scmp.ne.s32.totalorder %s96, %s110
      %p112 = scmp.eq.s32.totalorder %s19, 0
      %p113 = por %p111, %p112
      %s115 = sadd.s32 %s114, 1
      %p118 = scmp.eq.s32.totalorder %s13, 223
      %p119 = scmp.ne.s32.totalorder %s114, %s116
      %p120 = scmp.eq.s32.totalorder %s13, 0
      %p121 = por %p119, %p120
      %p122 = scmp.ne.s32.totalorder %s114, %s116
      %p123 = scmp.eq.s32.totalorder %s18, 223
      %p124 = por %p122, %p123
      %p125 = scmp.ne.s32.totalorder %s116, %s117
      %p126 = scmp.eq.s32.totalorder %s18, 0
      %p127 = por %p125, %p126
      %p128 = scmp.ne.s32.totalorder %s116, %s117
      %p129 = scmp.eq.s32.totalorder %s19, 223
      %p130 = por %p128, %p129
      %p132 = scmp.ne.s32.totalorder %s117, %s131
      %p133 = scmp.eq.s32.totalorder %s19, 0
      %p134 = por %p132, %p133
      %s135 = ssub.s32 %s20, %s39
      %s136 = ssub.s32 %s21, %s35
      %s137 = sor.u32 %s135, %s136
      %p138 = scmp.eq.s32.totalorder %s137, 0
      %s140 = sadd.s32 %s139, 1
      %s141 = scalar_select %p138, %s139, %s140
      %p144 = pneg %p138
      %p145 = scmp.eq.s32.totalorder %s13, 223
      %p146 = por %p144, %p145
      %p147 = scmp.ne.s32.totalorder %s139, %s142
      %p148 = scmp.eq.s32.totalorder %s13, 0
      %p149 = por %p147, %p148
      %p150 = scmp.ne.s32.totalorder %s139, %s142
      %p151 = scmp.eq.s32.totalorder %s18, 223
      %p152 = por %p150, %p151
      %p153 = scmp.ne.s32.totalorder %s142, %s143
      %p154 = scmp.eq.s32.totalorder %s18, 0
      %p155 = por %p153, %p154
      %p156 = scmp.ne.s32.totalorder %s142, %s143
      %p157 = scmp.eq.s32.totalorder %s19, 223
      %p158 = por %p156, %p157
      %p160 = scmp.ne.s32.totalorder %s143, %s159
      %p161 = scmp.eq.s32.totalorder %s19, 0
      %p162 = por %p160, %p161
      %p163 = scmp.le.s32.totalorder 1, %s13
      %p164 = scmp.lt.s32.totalorder %s13, 225
      %p165 = pnand %p163, %p164
      %p166 = pneg %p165
      // Predicated region
      $region9: #{conv_spatial.1} parent=5 // pred_check
        _
      $region10: #{conv_spatial.1} parent=5 // pred_check_branch
        %168 = sbr.rel (%p165) target = $region12
      $region11: #{conv_spatial.1} parent=5 // pred_region
        %s169 = ssub.s32 %s13, 1
        // Predicated region
        $region13: #{conv_spatial.1} parent=11 // pred_check
          %p170 = pneg %p85
        $region14: #{conv_spatial.1} parent=11 // pred_check_branch
          %172 = sbr.rel (%p170) target = $region16
        $region15: #{conv_spatial.1} parent=11 // pred_region
          _
        $region16: #{conv_spatial.1} parent=11 // pred_fallthru
          _
        // Predicated region
        $region17: #{conv_spatial.1} parent=11 // pred_check
          %p173 = pneg %p106
        $region18: #{conv_spatial.1} parent=11 // pred_check_branch
          %175 = sbr.rel (%p173) target = $region20
        $region19: #{conv_spatial.1} parent=11 // pred_region
          _
        $region20: #{conv_spatial.1} parent=11 // pred_fallthru
          _
        // Predicated region
        $region21: #{conv_spatial.1} parent=11 // pred_check
          %p176 = pneg %p127
        $region22: #{conv_spatial.1} parent=11 // pred_check_branch
          %178 = sbr.rel (%p176) target = $region24
        $region23: #{conv_spatial.1} parent=11 // pred_region
          _
        $region24: #{conv_spatial.1} parent=11 // pred_fallthru
          _
      $region12: #{conv_spatial.1} parent=5 // pred_fallthru
        _
      %p179 = scmp.lt.s32.totalorder %s13, 224
      // Predicated region
      $region25: #{conv_spatial.1} parent=5 // pred_check
        %p180 = pneg %p179
      $region26: #{conv_spatial.1} parent=5 // pred_check_branch
        %182 = sbr.rel (%p180) target = $region28
      $region27: #{conv_spatial.1} parent=5 // pred_region
        // Predicated region
        $region29: #{conv_spatial.1} parent=27 // pred_check
          %p183 = pneg %p58
        $region30: #{conv_spatial.1} parent=27 // pred_check_branch
          %185 = sbr.rel (%p183) target = $region32
        $region31: #{conv_spatial.1} parent=27 // pred_region
          %s186 = smul.u32 %s21, 2
          %s187 = sadd.s32 %s186, %s22
          %p188 = scmp.lt.s32.totalorder %s20, 1
          %s189 = scalar_select %p188, %s20, 1
          %p190 = scmp.lt.s32.totalorder %s187, 37
          %s191 = scalar_select %p190, %s187, 37
          %s192 = smul.addr %s191, 2
          %s193 = smul.addr %s189, 76
          %s194 = sadd.s32 %s192, %s193
          %s195 = smul.addr %s194, 8
          %s196 = scalar_lea.vmem %s0, %s195
          %s197 = smul.u32 %s21, 2
          %s198 = sadd.s32 %s197, %s22
        $region32: #{conv_spatial.1} parent=27 // pred_fallthru
          _
      $region28: #{conv_spatial.1} parent=5 // pred_fallthru
        _
      %p199 = scmp.le.s32.totalorder 1, %s13
      %p200 = scmp.lt.s32.totalorder %s13, 225
      %p201 = pnand %p199, %p200
      %p202 = pneg %p201
      // Predicated region
      $region33: #{conv_spatial.1} parent=5 // pred_check
        _
      $region34: #{conv_spatial.1} parent=5 // pred_check_branch
        %204 = sbr.rel (%p201) target = $region36
      $region35: #{conv_spatial.1} parent=5 // pred_region
        %s205 = ssub.s32 %s13, 1
        %s206 = smul.u32 %s24, 2
        %s207 = sadd.s32 %s206, %s25
        %p208 = scmp.lt.s32.totalorder %s23, 1
        %s209 = scalar_select %p208, %s23, 1
        %p210 = scmp.lt.s32.totalorder %s207, 37
        %s211 = scalar_select %p210, %s207, 37
        %s212 = smul.addr %s211, 2
        %s213 = smul.addr %s209, 76
        %s214 = sadd.s32 %s212, %s213
        %s215 = smul.addr %s214, 8
        %s216 = scalar_lea.vmem %s0, %s215
        %p217 = pneg %p64
        %p218 = pneg %p61
        %p219 = pneg %p85
        %p220 = pneg %p82
        %p221 = pneg %p106
        %p222 = pneg %p103
        %p223 = pneg %p127
        %p224 = pneg %p124
        %p225 = pneg %p155
        %p226 = pneg %p152
        %s227 = sand.u32 %s142, 1
        %s228 = scalar_lea.sflag [#allocation4], %s227
        %s229 = sand.u32 %s142, 1
        %s230 = smul.addr %s229, 16
        %s231 = scalar_lea.vmem [#allocation3], %s230
        %s232 = smul.u32 %s24, 2
        %s233 = sadd.s32 %s232, %s25
        %p234 = scmp.lt.s32.totalorder %s23, 1
        %s235 = scalar_select %p234, %s23, 1
        %p236 = scmp.lt.s32.totalorder %s233, 37
        %s237 = scalar_select %p236, %s233, 37
        %s238 = smul.addr %s237, 2
        %s239 = smul.addr %s235, 76
        %s240 = sadd.s32 %s238, %s239
        %s241 = smul.addr %s240, 8
        %s242 = scalar_lea.vmem %s0, %s241
        %s243 = smul.u32 %s24, 2
        %s244 = sadd.s32 %s243, %s25
        %p245 = scmp.eq.s32.totalorder %s25, 0
        // Predicated region
        $region37: #{conv_spatial.1} parent=35 // pred_check
          %p246 = pneg %p245
        $region38: #{conv_spatial.1} parent=35 // pred_check_branch
          %248 = sbr.rel (%p246) target = $region40
        $region39: #{conv_spatial.1} parent=35 // pred_region
          %vm249 = vcmask 523264
          %250 = vst.msk [vmem:[#allocation2] sm:$0xff] %vm249, 0.0
          %251 = vst.msk [vmem:[#allocation2 + $0x8] sm:$0xff] %vm249, 0.0
        $region40: #{conv_spatial.1} parent=35 // pred_fallthru
          _
        %v252 = vld [vmem:[%s242] sm:$0xff]
        %v253 = vld [vmem:[%s242 + $0x8] sm:$0xff]
        %s254 = smul.u32 %s25, 24
        %s255 = scalar_lea.vmem %s1, %s254
        %v256 = vld [vmem:[%s255] sm:$0xff]
        %v257 = vld [vmem:[%s255 + $0x8] sm:$0xff]
        %v258 = vld [vmem:[%s255 + $0x10] sm:$0x1f]
        %v259 = vld [vmem:[#allocation2] sm:$0xff]
        %v260 = vld [vmem:[#allocation2 + $0x8] sm:$0xff]
        %vm261 = vcmask 171008
        %v263 = vsel %vm261, %v252, 0
        %v266 = vsel %vm261, %v253, 0
        %vm268 = vcmask 1044480
        %v270 = vsel %vm268, %v258, 0
        %272 = vmatprep.subr.mxu0 0.0
        %273 = vmatpush1.msra.mxu0 0.0
        %274 = vmatprep.subr.mxu0 0.0
        %275 = vmatpush1.msra.mxu0 0.0
        %276 = vmatprep.subr.mxu0 0.0
        %277 = vmatpush1.msra.mxu0 0.0
        %278 = vmatprep.subr.mxu0 0.0
        %279 = vmatpush1.msra.mxu0 0.0
        %280 = vmatprep.subr.mxu0 0.0
        %281 = vmatpush1.msra.mxu0 0.0
        %282 = vmatprep.subr.mxu0 0.0
        %283 = vmatpush1.msra.mxu0 0.0
        %284 = vmatprep.subr.mxu0 0.0
        %285 = vmatpush1.msra.mxu0 0.0
        %286 = vmatprep.subr.mxu0 0.0
        %287 = vmatpush1.msra.mxu0 0.0
        %288 = vmatprep.subr.mxu0 0.0
        %289 = vmatpush1.msra.mxu0 0.0
        %290 = vmatprep.subr.mxu0 0.0
        %291 = vmatpush1.msra.mxu0 0.0
        %292 = vmatprep.subr.mxu0 0.0
        %293 = vmatpush1.msra.mxu0 0.0
        %294 = vmatprep.subr.mxu0 0.0
        %295 = vmatpush1.msra.mxu0 0.0
        %296 = vmatprep.subr.mxu0 0.0
        %297 = vmatpush1.msra.mxu0 0.0
        %298 = vmatprep.subr.mxu0 0.0
        %299 = vmatpush1.msra.mxu0 %v270
        %300 = vmatprep.subr.mxu0 0.0
        %301 = vmatpush1.msra.mxu0 %v257
        %302 = vmatprep.subr.mxu0 0.0
        %303 = vmatpush1.msra.mxu0 %v256
        %304 = vmatprep.subr.mxu0 0.0
        %305 = vmatpush2.msra.mxu0 0.0
        %306 = vmatprep.subr.mxu0 0.0
        %307 = vmatpush2.msra.mxu0 0.0
        %308 = vmatprep.subr.mxu0 0.0
        %309 = vmatpush2.msra.mxu0 0.0
        %310 = vmatprep.subr.mxu0 0.0
        %311 = vmatpush2.msra.mxu0 0.0
        %312 = vmatprep.subr.mxu0 0.0
        %313 = vmatpush2.msra.mxu0 0.0
        %314 = vmatprep.subr.mxu0 0.0
        %315 = vmatpush2.msra.mxu0 0.0
        %316 = vmatprep.subr.mxu0 0.0
        %317 = vmatpush2.msra.mxu0 0.0
        %318 = vmatprep.subr.mxu0 0.0
        %319 = vmatpush2.msra.mxu0 0.0
        %320 = vmatprep.subr.mxu0 0.0
        %321 = vmatpush2.msra.mxu0 0.0
        %322 = vmatprep.subr.mxu0 0.0
        %323 = vmatpush2.msra.mxu0 0.0
        %324 = vmatprep.subr.mxu0 0.0
        %325 = vmatpush2.msra.mxu0 0.0
        %326 = vmatprep.subr.mxu0 0.0
        %327 = vmatpush2.msra.mxu0 0.0
        %328 = vmatprep.subr.mxu0 0.0
        %329 = vmatpush2.msra.mxu0 0.0
        %330 = vmatprep.subr.mxu0 0.0
        %331 = vmatpush2.msra.mxu0 0.0
        %332 = vmatprep.subr.mxu0 0.0
        %333 = vmatpush2.msra.mxu0 0.0
        %334 = vmatprep.subr.mxu0 0.0
        %335 = vmatpush2.msra.mxu0 0.0
        %336 = vmatprep.mubr.f32.mxu0 0.0
        %337 = vmatmul.mubr.f32.gmra.mxu0 %v263
        %v338 = vpop.f32.mrf.mxu0
        %v339 = vadd.f32 0.0, %v338
        %v340 = vpop.f32.mrf.mxu0
        %341 = vmatprep.mubr.f32.mxu0 0.0
        %342 = vmatmul.mubr.f32.gmra.mxu0 %v266
        %v343 = vpop.f32.mrf.mxu0
        %v344 = vadd.f32 0.0, %v343
        %v345 = vpop.f32.mrf.mxu0
        %346 = vdwg.mxu0
        %v347 = vadd.f32 %v259, %v339
        %v348 = vadd.f32 %v260, %v344
        %vm349 = vcmask 523264
        %350 = vst.msk [vmem:[#allocation2] sm:$0xff] %vm349, %v347
        %351 = vst.msk [vmem:[#allocation2 + $0x8] sm:$0xff] %vm349, %v348
        %p352 = scmp.eq.s32.totalorder %s25, 6
        // Predicated region
        $region41: #{conv_spatial.1} parent=35 // pred_check
          %p353 = pneg %p352
        $region42: #{conv_spatial.1} parent=35 // pred_check_branch
          %355 = sbr.rel (%p353) target = $region44
        $region43: #{conv_spatial.1} parent=35 // pred_region
          %v356 = vld [vmem:[#allocation2] sm:$0xff]
          %v357 = vld [vmem:[#allocation2 + $0x8] sm:$0xff]
          %v358 = vld [vmem:[%s2] sm:$0x1]
          %v360 = vlaneseq
          %v361 = vshrl.u32 %v360, 7
          %v362 = vsub.s32 0, %v361
          %v363 = vrot.slane %v358, %v362
          %v365 = vmul.f32 %v356, %v363
          %v366 = vmul.f32 %v357, %v363
          %v367 = vld [vmem:[%s3] sm:$0x1]
          %v369 = vlaneseq
          %v370 = vshrl.u32 %v369, 7
          %v371 = vsub.s32 0, %v370
          %v372 = vrot.slane %v367, %v371
          %v374 = vadd.f32 %v365, %v372
          %v375 = vadd.f32 %v366, %v372
          %v376 = vmax.f32 %v374, 0.0
          %v377 = vmax.f32 %v375, 0.0
          %378 = vst.msk [vmem:[%s231] sm:$0xff] %vm349, %v376
          %379 = vst.msk [vmem:[%s231 + $0x8] sm:$0xff] %vm349, %v377
        $region44: #{conv_spatial.1} parent=35 // pred_fallthru
          _
        %s380 = sand.u32 %s142, 1
        %s381 = scalar_lea.sflag [#allocation4], %s380
        %s382 = sand.u32 %s142, 1
        %s383 = smul.addr %s382, 16
        %s384 = scalar_lea.vmem [#allocation3], %s383
        // Predicated region
        $region45: #{conv_spatial.1} parent=35 // pred_check
          %p385 = pneg %p152
        $region46: #{conv_spatial.1} parent=35 // pred_check_branch
          %387 = sbr.rel (%p385) target = $region48
        $region47: #{conv_spatial.1} parent=35 // pred_region
          %s389 = ssub.s32 256, 256
          %390 = vsyncadd %s381, %s389
          %s391 = smul.addr %s24, 2
          %s392 = smul.addr %s23, 32
          %s393 = sadd.s32 %s391, %s392
          %s394 = smul.addr %s393, 128
          %s395 = scalar_lea.hbm %s4, %s394
          %s396 = sshll.u32 %s384, 4
          %s397 = int_to_ptr.vmem [resolvable:$true] %s396
          %402 = dma.vmem_to_hbm [thread:$0]  %s397, 256, %s395, %s381, 128, 128, 8
        $region48: #{conv_spatial.1} parent=35 // pred_fallthru
          _
      $region36: #{conv_spatial.1} parent=5 // pred_fallthru
        _
      %p403 = scmp.le.s32.totalorder 2, %s13
      // Predicated region
      $region49: #{conv_spatial.1} parent=5 // pred_check
        %p404 = pneg %p403
      $region50: #{conv_spatial.1} parent=5 // pred_check_branch
        %406 = sbr.rel (%p404) target = $region52
      $region51: #{conv_spatial.1} parent=5 // pred_region
        %s407 = ssub.s32 %s13, 2
        // Predicated region
        $region53: #{conv_spatial.1} parent=51 // pred_check
          %p408 = pneg %p158
        $region54: #{conv_spatial.1} parent=51 // pred_check_branch
          %410 = sbr.rel (%p408) target = $region56
        $region55: #{conv_spatial.1} parent=51 // pred_region
          %s411 = sand.u32 %s143, 1
          %s412 = scalar_lea.sflag [#allocation4], %s411
          %s413 = sand.u32 %s143, 1
          %s414 = smul.addr %s413, 16
          %s415 = scalar_lea.vmem [#allocation3], %s414
          %416 = dma.done %s412, 256
        $region56: #{conv_spatial.1} parent=51 // pred_fallthru
          _
      $region52: #{conv_spatial.1} parent=5 // pred_fallthru
        _
    $region6: #{conv_spatial.1} parent=1 // loop_footer
      %s17 = sadd.s32 1, %s13
    $region7: #{conv_spatial.1} parent=1 // loop_footer_branch
      %12 = sbr.rel target = $region3
    $region8: #{conv_spatial.1} parent=1 // loop_exit
      _
    %417 = vsyncpa [#allocation4], 1
    %s418 = scalar_lea.sflag [#allocation4], 1
    %419 = vsyncpa %s418, 1

</llo_original>
